<compile_context>
chip_gen: v5e
topology: v5e:2x2
jax: 0.10.0
libtpu: 0.0.40
codegen_flags: <defaults>
</compile_context>

<pallas_src>
import math
from functools import partial

import jax
import jax.numpy as jnp
from jax import lax
from jax.experimental import pallas as pl
from jax.experimental.pallas import tpu as pltpu


# --------------------------------------------------------------------------- #
# Small helpers
# --------------------------------------------------------------------------- #
def _cdiv(a, b):
    return -(-a // b)


def _round_up(a, b):
    return _cdiv(a, b) * b


def _gelu(x, approx):
    if approx:
        # tanh approximation -> transcendental lands on the EUP slot.
        return jax.nn.gelu(x, approximate=True)
    # PyTorch nn.GELU() default is the exact erf formulation.
    return 0.5 * x * (1.0 + lax.erf(x * (1.0 / math.sqrt(2.0))))


def _vmem_cap_bytes():
    try:
        info = pltpu.get_tpu_info()
        cap = getattr(info, "vmem_capacity_bytes", None)
        if cap:
            return int(cap)
    except Exception:
        pass
    return 64 * 2**20  # conservative: v7x per-TensorCore VMEM


_BUFFERED1_OK = None


def _buffered1_supported():
    """Probe pl.Buffered(1) support once with a tiny kernel (explicit, cached)."""
    global _BUFFERED1_OK
    if _BUFFERED1_OK is None:
        try:
            def _k(a_ref, c_ref, o_ref):
                o_ref[...] = a_ref[...] + c_ref[...]

            const = pl.BlockSpec((8, 128), lambda i: (0, 0),
                                 pipeline_mode=pl.Buffered(1))
            f = pl.pallas_call(
                _k,
                out_shape=jax.ShapeDtypeStruct((16, 128), jnp.float32),
                grid_spec=pltpu.PrefetchScalarGridSpec(
                    num_scalar_prefetch=0,
                    grid=(2,),
                    in_specs=[pl.BlockSpec((8, 128), lambda i: (i, 0)), const],
                    out_specs=pl.BlockSpec((8, 128), lambda i: (i, 0))),
            )
            jax.block_until_ready(f(jnp.zeros((16, 128), jnp.float32),
                                    jnp.zeros((8, 128), jnp.float32)))
            _BUFFERED1_OK = True
        except Exception:
            _BUFFERED1_OK = False
    return _BUFFERED1_OK


# --------------------------------------------------------------------------- #
# Kernels
# --------------------------------------------------------------------------- #
def _mlp_kernel_resident(x_ref, w1_ref, b1_ref, w2_ref, b2_ref, o_ref, *,
                         approx_gelu):
    # Fused fc1 -> bias -> GELU -> fc2 -> bias; weights fully VMEM-resident.
    h = jnp.dot(x_ref[...], w1_ref[...],
                preferred_element_type=jnp.float32)          # (tm, H) f32 acc
    h = _gelu(h + b1_ref[...], approx_gelu)                  # f32 bias + GELU
    y = jnp.dot(h.astype(w2_ref.dtype), w2_ref[...],
                preferred_element_type=jnp.float32)          # (tm, D) f32 acc
    o_ref[...] = (y + b2_ref[...]).astype(o_ref.dtype)


def _mlp_kernel_hchunk(x_ref, w1_ref, b1_ref, w2_ref, b2_ref, o_ref, acc_ref, *,
                       approx_gelu):
    # Hidden dim is chunked along grid axis 1 ("arbitrary"); accumulate the
    # fc2 partial products in a (tm, D_in) f32 VMEM scratch.
    hk = pl.program_id(1)

    @pl.when(hk == 0)
    def _():
        acc_ref[...] = jnp.zeros_like(acc_ref)

    h = jnp.dot(x_ref[...], w1_ref[...],
                preferred_element_type=jnp.float32)          # (tm, th) f32
    h = _gelu(h + b1_ref[...], approx_gelu)
    acc_ref[...] += jnp.dot(h.astype(w2_ref.dtype), w2_ref[...],
                            preferred_element_type=jnp.float32)

    @pl.when(hk == pl.num_programs(1) - 1)
    def _():
        o_ref[...] = (acc_ref[...] + b2_ref[...]).astype(o_ref.dtype)


# --------------------------------------------------------------------------- #
# VMEM estimates (bytes)
# --------------------------------------------------------------------------- #
def _est_resident(tm, d_in, h, cbytes, obytes, wbuf):
    return (2 * d_in * h * cbytes * wbuf            # W1 + W2 resident
            + (h + d_in) * 4 * wbuf                 # biases (f32)
            + tm * d_in * (cbytes * 2 + obytes * 2)  # x / out (double-buffered)
            + tm * h * 4                            # f32 intermediate h
            + tm * max(h, d_in) * 4)                # temporaries slack


def _est_chunked(tm, th, d_in, cbytes, obytes):
    return (2 * d_in * th * cbytes * 2              # W1/W2 chunks (2 buffers)
            + (th + d_in) * 4 * 2                   # bias chunks
            + tm * d_in * (cbytes * 2 + obytes * 2)  # x / out tiles
            + tm * d_in * 4                         # f32 accumulator scratch
            + tm * th * 4 * 2)                      # f32 h chunk + temps


# --------------------------------------------------------------------------- #
# Forward implementation (jitted; tile / dtype decisions are static)
# --------------------------------------------------------------------------- #
@partial(jax.jit, static_argnames=("tile_m", "tile_h", "compute_dtype",
                                   "single_buffer_weights", "approx_gelu"))
def _mlp_impl(x, w1, b1, w2, b2, *, tile_m, tile_h, compute_dtype,
              single_buffer_weights, approx_gelu):
    orig_shape = x.shape
    d_in = orig_shape[-1]
    h = w1.shape[1]
    m = 1
    for d in orig_shape[:-1]:
        m *= int(d)
    out_dtype = x.dtype

    cbytes = int(jnp.dtype(compute_dtype).itemsize)
    obytes = int(jnp.dtype(out_dtype).itemsize)
    sub = 16 if cbytes == 2 else 8
    wbuf = 1 if single_buffer_weights else 2

    cap = _vmem_cap_bytes()
    budget = max(16 * 2**20, cap - 20 * 2**20)

    # --- row tile: adaptive (minimal padding), even step count for megacore ---
    if tile_m is None:
        if m <= 512:
            tm = _round_up(max(m, 1), sub)
        else:
            n = _cdiv(m, 512)
            if n > 1 and n % 2:
                n += 1
            tm = _round_up(_cdiv(m, n), sub)
    else:
        tm = _round_up(max(int(tile_m), 1), sub)
    tm = min(tm, _round_up(max(m, 1), sub))
    m_pad = _round_up(max(m, 1), tm)
    m_steps = m_pad // tm

    # --- hidden tile: full residency if it fits VMEM, else 128-multiple chunk --
    if tile_h is None:
        if _est_resident(tm, d_in, h, cbytes, obytes, wbuf) <= budget:
            th = h
        else:
            th = min(_round_up(h, 128), 2048)
            while th > 128 and _est_chunked(tm, th, d_in, cbytes, obytes) > budget:
                th -= 128
            th = max(th, 128)
    else:
        th = int(tile_h)

    if th >= h:
        th, h_pad, h_steps = h, h, 1
    else:
        th = max(128, _round_up(th, 128))
        if th >= h:
            th, h_pad, h_steps = h, h, 1
        else:
            h_pad = _round_up(h, th)
            h_steps = h_pad // th

    # --- VMEM limit: clamp to physical capacity minus headroom ---------------
    if h_steps == 1:
        est = _est_resident(tm, d_in, h_pad, cbytes, obytes, wbuf)
    else:
        est = _est_chunked(tm, th, d_in, cbytes, obytes)
    vmem_limit = max(32 * 2**20, int(est) + int(est) // 4 + 4 * 2**20)
    vmem_limit = min(vmem_limit, cap - 8 * 2**20)
    vmem_limit = int(max(vmem_limit, 16 * 2**20))

    # --- prepare operands (pad + cast fuse under jit) -------------------------
    x2d = x.reshape(m, d_in)
    if m_pad != m:
        x2d = jnp.pad(x2d, ((0, m_pad - m), (0, 0)))
    x2d = x2d.astype(compute_dtype)

    w1c = w1.astype(compute_dtype)
    w2c = w2.astype(compute_dtype)
    b1r = b1.reshape(1, h).astype(jnp.float32)
    b2r = b2.reshape(1, d_in).astype(jnp.float32)
    if h_pad != h:
        # Zero-padded hidden columns contribute GELU(0)=0 and W2 rows are 0,
        # so padded chunks add exactly nothing.
        w1c = jnp.pad(w1c, ((0, 0), (0, h_pad - h)))
        b1r = jnp.pad(b1r, ((0, 0), (0, h_pad - h)))
        w2c = jnp.pad(w2c, ((0, h_pad - h), (0, 0)))

    weight_reads = 1 if h_steps == 1 else m_steps
    cost = pl.CostEstimate(
        flops=4 * m_pad * d_in * h_pad,             # two matmuls
        transcendentals=m_pad * h_pad,              # erf / tanh in GELU
        bytes_accessed=int(m_pad * d_in * cbytes
                           + weight_reads * 2 * d_in * h_pad * cbytes
                           + (h_pad + d_in) * 4
                           + m_pad * d_in * obytes))

    if h_steps == 1:
        # Fast path: weights fully resident in VMEM, optionally single-buffered.
        def _const_spec(shape):
            if single_buffer_weights:
                return pl.BlockSpec(shape, lambda i: (0, 0),
                                    pipeline_mode=pl.Buffered(1))
            return pl.BlockSpec(shape, lambda i: (0, 0))

        call = pl.pallas_call(
            partial(_mlp_kernel_resident, approx_gelu=approx_gelu),
            out_shape=jax.ShapeDtypeStruct((m_pad, d_in), out_dtype),
            grid_spec=pltpu.PrefetchScalarGridSpec(
                num_scalar_prefetch=0,
                grid=(m_steps,),
                in_specs=[
                    pl.BlockSpec((tm, d_in), lambda i: (i, 0)),
                    _const_spec((d_in, h_pad)),
                    _const_spec((1, h_pad)),
                    _const_spec((h_pad, d_in)),
                    _const_spec((1, d_in)),
                ],
                out_specs=pl.BlockSpec((tm, d_in), lambda i: (i, 0)),
            ),
            compiler_params=pltpu.CompilerParams(
                dimension_semantics=("parallel",),
                vmem_limit_bytes=vmem_limit),
            cost_estimate=cost,
        )
    else:
        # H-chunked path: bounded VMEM regardless of hidden size / f32 compute.
        call = pl.pallas_call(
            partial(_mlp_kernel_hchunk, approx_gelu=approx_gelu),
            out_shape=jax.ShapeDtypeStruct((m_pad, d_in), out_dtype),
            grid_spec=pltpu.PrefetchScalarGridSpec(
                num_scalar_prefetch=0,
                grid=(m_steps, h_steps),
                in_specs=[
                    pl.BlockSpec((tm, d_in), lambda i, k: (i, 0)),
                    pl.BlockSpec((d_in, th), lambda i, k: (0, k)),
                    pl.BlockSpec((1, th), lambda i, k: (0, k)),
                    pl.BlockSpec((th, d_in), lambda i, k: (k, 0)),
                    pl.BlockSpec((1, d_in), lambda i, k: (0, 0)),
                ],
                out_specs=pl.BlockSpec((tm, d_in), lambda i, k: (i, 0)),
                scratch_shapes=[pltpu.VMEM((tm, d_in), jnp.float32)],
            ),
            compiler_params=pltpu.CompilerParams(
                dimension_semantics=("parallel", "arbitrary"),
                vmem_limit_bytes=vmem_limit),
            cost_estimate=cost,
        )

    out2d = call(x2d, w1c, b1r, w2c, b2r)
    return out2d[:m].reshape(orig_shape)


def mlp_forward(x, w1, b1, w2, b2, *, tile_m=None, tile_h=None,
                compute_dtype=jnp.bfloat16, approx_gelu=False):
    """x: (..., D_in); w1: (D_in, H); b1: (H,); w2: (H, D_in); b2: (D_in,)."""
    compute_dtype = jnp.dtype(compute_dtype)
    single_buf = _buffered1_supported()
    return _mlp_impl(x, w1, b1, w2, b2,
                     tile_m=tile_m, tile_h=tile_h,
                     compute_dtype=compute_dtype,
                     single_buffer_weights=single_buf,
                     approx_gelu=approx_gelu)


# --------------------------------------------------------------------------- #
# Pure-JAX reference (matches torch: Linear -> GELU(erf) -> Linear, dropout p=0)
# --------------------------------------------------------------------------- #
def reference_mlp(x, w1, b1, w2, b2):
    h = jnp.einsum("...d,dh->...h", x, w1) + b1
    h = 0.5 * h * (1.0 + lax.erf(h * (1.0 / math.sqrt(2.0))))
    return jnp.einsum("...h,hd->...d", h, w2) + b2


if __name__ == "__main__":
    key = jax.random.PRNGKey(0)
    B, S, D_in, Hid = 2, 8, 32, 64

    k_x, k_w1, k_b1, k_w2, k_b2 = jax.random.split(key, 5)
    x = jax.random.normal(k_x, (B, S, D_in), dtype=jnp.float32)

    # Deterministic init mimicking torch.nn.Linear (uniform(-1/sqrt(fan_in), ...)).
    lim1 = 1.0 / math.sqrt(D_in)
    lim2 = 1.0 / math.sqrt(Hid)
    w1 = jax.random.uniform(k_w1, (D_in, Hid), jnp.float32, -lim1, lim1)
    b1 = jax.random.uniform(k_b1, (Hid,), jnp.float32, -lim1, lim1)
    w2 = jax.random.uniform(k_w2, (Hid, D_in), jnp.float32, -lim2, lim2)
    b2 = jax.random.uniform(k_b2, (D_in,), jnp.float32, -lim2, lim2)

    ref = reference_mlp(x, w1, b1, w2, b2)

    # Default (performance) path: bf16 matmuls with f32 accumulation.
    out_bf16 = jax.block_until_ready(mlp_forward(x, w1, b1, w2, b2))
    assert out_bf16.shape == (B, S, D_in)
    assert jnp.allclose(out_bf16, ref, atol=5e-2, rtol=5e-2), \
        "bf16 path mismatch vs reference"

    # Full-precision path: tight check against the reference.
    out_f32 = jax.block_until_ready(
        mlp_forward(x, w1, b1, w2, b2, compute_dtype=jnp.float32))
    assert jnp.allclose(out_f32, ref, atol=1e-4, rtol=1e-4), \
        "f32 path mismatch vs reference"

    # Exercise the H-chunked accumulator path (forced small tiles, f32, tight tol).
    Hid2 = 256
    k2 = jax.random.split(jax.random.PRNGKey(1), 4)
    lim2b = 1.0 / math.sqrt(Hid2)
    w1b = jax.random.uniform(k2[0], (D_in, Hid2), jnp.float32, -lim1, lim1)
    b1b = jax.random.uniform(k2[1], (Hid2,), jnp.float32, -lim1, lim1)
    w2b = jax.random.uniform(k2[2], (Hid2, D_in), jnp.float32, -lim2b, lim2b)
    b2b = jax.random.uniform(k2[3], (D_in,), jnp.float32, -lim2b, lim2b)
    refb = reference_mlp(x, w1b, b1b, w2b, b2b)
    outb = jax.block_until_ready(
        mlp_forward(x, w1b, b1b, w2b, b2b, tile_m=8, tile_h=128,
                    compute_dtype=jnp.float32))
    assert jnp.allclose(outb, refb, atol=1e-4, rtol=1e-4), \
        "H-chunked path mismatch vs reference"

    print("KERNEL_OK")
</pallas_src>

<mosaic_0001>
module attributes {stable_mosaic.version = 11 : i64} {
  func.func @_k(%arg0: i32, %arg1: memref<8x128xf32, #tpu.memory_space<vmem>>, %arg2: memref<8x128xf32, #tpu.memory_space<vmem>>, %arg3: memref<8x128xf32, #tpu.memory_space<vmem>>) attributes {dimension_semantics = [#tpu.dimension_semantics<arbitrary>], iteration_bounds = array<i64: 2>, scalar_prefetch = 0 : i64, scratch_operands = 0 : i64, tpu.core_type = #tpu.core_type<tc>, window_params = [{transform_indices = @transform_0, window_bounds = array<i64: 8, 128>}, {pipeline_mode = #tpu.pipeline_mode<synchronous>, transform_indices = @transform_1, window_bounds = array<i64: 8, 128>}, {transform_indices = @transform_2, window_bounds = array<i64: 8, 128>}]} {
    %c0 = arith.constant 0 : index
    %c0_0 = arith.constant 0 : index
    %0 = vector.load %arg1[%c0, %c0_0] : memref<8x128xf32, #tpu.memory_space<vmem>>, vector<8x128xf32>
    %c0_1 = arith.constant 0 : index
    %c0_2 = arith.constant 0 : index
    %1 = vector.load %arg2[%c0_1, %c0_2] : memref<8x128xf32, #tpu.memory_space<vmem>>, vector<8x128xf32>
    %2 = arith.addf %0, %1 : vector<8x128xf32>
    %c0_3 = arith.constant 0 : index
    %c0_4 = arith.constant 0 : index
    %3 = vector.load %arg3[%c0_3, %c0_4] : memref<8x128xf32, #tpu.memory_space<vmem>>, vector<8x128xf32>
    tpu.vector_store %arg3[%c0_3, %c0_4], %2 {strides = array<i32>} : memref<8x128xf32, #tpu.memory_space<vmem>>, vector<8x128xf32>,
    return
  }
  func.func @transform_0(%arg0: i32) -> (i32, i32) {
    %c0_i32 = arith.constant 0 : i32
    %c0_i32_0 = arith.constant 0 : i32
    return %arg0, %c0_i32 : i32, i32
  }
  func.func @transform_1(%arg0: i32) -> (i32, i32) {
    %c0_i32 = arith.constant 0 : i32
    %c0_i32_0 = arith.constant 0 : i32
    %c0_i32_1 = arith.constant 0 : i32
    return %c0_i32, %c0_i32_0 : i32, i32
  }
  func.func @transform_2(%arg0: i32) -> (i32, i32) {
    %c0_i32 = arith.constant 0 : i32
    %c0_i32_0 = arith.constant 0 : i32
    return %arg0, %c0_i32 : i32, i32
  }
}

module attributes {stable_mosaic.version = 11 : i64} {
  func.func @_mlp_kernel_resident(%arg0: i32, %arg1: memref<16x32xbf16, #tpu.memory_space<vmem>>, %arg2: memref<32x64xbf16, #tpu.memory_space<vmem>>, %arg3: memref<1x64xf32, #tpu.memory_space<vmem>>, %arg4: memref<64x32xbf16, #tpu.memory_space<vmem>>, %arg5: memref<1x32xf32, #tpu.memory_space<vmem>>, %arg6: memref<16x32xf32, #tpu.memory_space<vmem>>) attributes {dimension_semantics = [#tpu.dimension_semantics<parallel>], iteration_bounds = array<i64: 1>, scalar_prefetch = 0 : i64, scratch_operands = 0 : i64, tpu.core_type = #tpu.core_type<tc>, window_params = [{transform_indices = @transform_0, window_bounds = array<i64: 16, 32>}, {pipeline_mode = #tpu.pipeline_mode<synchronous>, transform_indices = @transform_1, window_bounds = array<i64: 32, 64>}, {pipeline_mode = #tpu.pipeline_mode<synchronous>, transform_indices = @transform_2, window_bounds = array<i64: 1, 64>}, {pipeline_mode = #tpu.pipeline_mode<synchronous>, transform_indices = @transform_3, window_bounds = array<i64: 64, 32>}, {pipeline_mode = #tpu.pipeline_mode<synchronous>, transform_indices = @transform_4, window_bounds = array<i64: 1, 32>}, {transform_indices = @transform_5, window_bounds = array<i64: 16, 32>}]} {
    %c0 = arith.constant 0 : index
    %c0_0 = arith.constant 0 : index
    %0 = vector.load %arg1[%c0, %c0_0] : memref<16x32xbf16, #tpu.memory_space<vmem>>, vector<16x32xbf16>
    %c0_1 = arith.constant 0 : index
    %c0_2 = arith.constant 0 : index
    %1 = vector.load %arg2[%c0_1, %c0_2] : memref<32x64xbf16, #tpu.memory_space<vmem>>, vector<32x64xbf16>
    %cst = arith.constant dense<0.000000e+00> : vector<16x64xf32>
    %2 = tpu.matmul %0, %1, %cst {dimension_numbers = #tpu.dot_dimension_numbers<[1], [0], [0], [1], [0, 0, 1, 1], [], []>} : vector<16x32xbf16>, vector<32x64xbf16>, vector<16x64xf32> -> vector<16x64xf32>
    %c0_3 = arith.constant 0 : index
    %c0_4 = arith.constant 0 : index
    %3 = vector.load %arg3[%c0_3, %c0_4] : memref<1x64xf32, #tpu.memory_space<vmem>>, vector<1x64xf32>
    %4 = vector.broadcast %3 : vector<1x64xf32> to vector<16x64xf32>
    %5 = arith.addf %2, %4 : vector<16x64xf32>
    %cst_5 = arith.constant 5.000000e-01 : f32
    %6 = vector.broadcast %cst_5 : f32 to vector<16x64xf32>
    %7 = arith.mulf %6, %5 : vector<16x64xf32>
    %cst_6 = arith.constant 0.707106769 : f32
    %8 = vector.broadcast %cst_6 : f32 to vector<16x64xf32>
    %9 = arith.mulf %5, %8 : vector<16x64xf32>
    %10 = math.erf %9 : vector<16x64xf32>
    %cst_7 = arith.constant 1.000000e+00 : f32
    %11 = vector.broadcast %cst_7 : f32 to vector<16x64xf32>
    %12 = arith.addf %11, %10 : vector<16x64xf32>
    %13 = arith.mulf %7, %12 : vector<16x64xf32>
    %14 = arith.truncf %13 : vector<16x64xf32> to vector<16x64xbf16>
    %c0_8 = arith.constant 0 : index
    %c0_9 = arith.constant 0 : index
    %15 = vector.load %arg4[%c0_8, %c0_9] : memref<64x32xbf16, #tpu.memory_space<vmem>>, vector<64x32xbf16>
    %cst_10 = arith.constant dense<0.000000e+00> : vector<16x32xf32>
    %16 = tpu.matmul %14, %15, %cst_10 {dimension_numbers = #tpu.dot_dimension_numbers<[1], [0], [0], [1], [0, 0, 1, 1], [], []>} : vector<16x64xbf16>, vector<64x32xbf16>, vector<16x32xf32> -> vector<16x32xf32>
    %c0_11 = arith.constant 0 : index
    %c0_12 = arith.constant 0 : index
    %17 = vector.load %arg5[%c0_11, %c0_12] : memref<1x32xf32, #tpu.memory_space<vmem>>, vector<1x32xf32>
    %18 = vector.broadcast %17 : vector<1x32xf32> to vector<16x32xf32>
    %19 = arith.addf %16, %18 : vector<16x32xf32>
    %c0_13 = arith.constant 0 : index
    %c0_14 = arith.constant 0 : index
    %20 = vector.load %arg6[%c0_13, %c0_14] : memref<16x32xf32, #tpu.memory_space<vmem>>, vector<16x32xf32>
    tpu.vector_store %arg6[%c0_13, %c0_14], %19 {strides = array<i32>} : memref<16x32xf32, #tpu.memory_space<vmem>>, vector<16x32xf32>,
    return
  }
  func.func @transform_0(%arg0: i32) -> (i32, i32) {
    %c0_i32 = arith.constant 0 : i32
    %c0_i32_0 = arith.constant 0 : i32
    return %arg0, %c0_i32 : i32, i32
  }
  func.func @transform_1(%arg0: i32) -> (i32, i32) {
    %c0_i32 = arith.constant 0 : i32
    %c0_i32_0 = arith.constant 0 : i32
    %c0_i32_1 = arith.constant 0 : i32
    return %c0_i32, %c0_i32_0 : i32, i32
  }
  func.func @transform_2(%arg0: i32) -> (i32, i32) {
    %c0_i32 = arith.constant 0 : i32
    %c0_i32_0 = arith.constant 0 : i32
    %c0_i32_1 = arith.constant 0 : i32
    return %c0_i32, %c0_i32_0 : i32, i32
  }
  func.func @transform_3(%arg0: i32) -> (i32, i32) {
    %c0_i32 = arith.constant 0 : i32
    %c0_i32_0 = arith.constant 0 : i32
    %c0_i32_1 = arith.constant 0 : i32
    return %c0_i32, %c0_i32_0 : i32, i32
  }
  func.func @transform_4(%arg0: i32) -> (i32, i32) {
    %c0_i32 = arith.constant 0 : i32
    %c0_i32_0 = arith.constant 0 : i32
    %c0_i32_1 = arith.constant 0 : i32
    return %c0_i32, %c0_i32_0 : i32, i32
  }
  func.func @transform_5(%arg0: i32) -> (i32, i32) {
    %c0_i32 = arith.constant 0 : i32
    %c0_i32_0 = arith.constant 0 : i32
    return %arg0, %c0_i32 : i32, i32
  }
}

</mosaic_0001>

<llo_original>
// kernel: tpu_custom_call.1
$region0: #{tpu_custom_call.1}
  #allocation0 [shape = 'u32[]', space=smem, size = 0x4, offset = 0x4, fixed_abs, tag = 'smem constant byte address 0x4 - core index']
  #allocation1 [shape = 'u32[72,128]{1,0:T(1,128)}', space=vmem, size = 0x9000, scoped, tag = 'internal scratch']
  %s0 = inlined_call_operand.hbm [shape: f32[16,128], index: 0, kind: input, shape index: {}]
  %s1 = inlined_call_operand.hbm [shape: f32[8,128], index: 1, kind: input, shape index: {}]
  %s2 = inlined_call_operand.hbm [shape: f32[16,128], index: 2, kind: output, shape index: {}]
  %s3 = sld [smem:[#allocation0]]
  $region49: #{tpu_custom_call.1} parent=0
    _
  %s5 = ssub.s32 1, %s3
  %s6 = scalar_select 0, %s5, %s3
  $region1: #{tpu_custom_call.1} parent=0
    #allocation2 [shape = 'u8[8192]{0}', space=vmem, size = 0x2000, scoped, tag = 'input window, operand 0']
    #allocation3 [shape = 's32[2]{0}', space=sflag, size = 0x8, scoped, tag = 'scoped memory for tpu_custom_call.1']
    #allocation4 [shape = 's32[2]{0}', space=sflag, size = 0x8, scoped, tag = 'scoped memory for tpu_custom_call.1']
    #allocation5 [shape = 'u8[4096]{0}', space=vmem, size = 0x1000, scoped, tag = 'input window, operand 1, single buffered']
    #allocation6 [shape = 's32[1]{0}', space=sflag, size = 0x4, scoped, tag = 'scoped memory for tpu_custom_call.1']
    #allocation7 [shape = 'u8[8192]{0}', space=vmem, size = 0x2000, scoped, tag = 'output window, operand 0']
    %7 = vsyncpa [#allocation3], 0
    %s8 = scalar_lea.sflag [#allocation3], 1
    %9 = vsyncpa %s8, 0
    %10 = vsyncpa [#allocation6], 0
    %11 = vsyncpa [#allocation4], 0
    %s12 = scalar_lea.sflag [#allocation4], 1
    %13 = vsyncpa %s12, 0
    loop: start=0, step=1, limit=4
    $region2: #{tpu_custom_call.1} parent=1 // loop_pre_header
      _
    $region3: #{tpu_custom_call.1} parent=1 // loop_header
      %s15 = sphi 0, %s19
      %p16 = scmp.ge.s32.totalorder %s15, 4
      %s25 = sphi 0, %s27
      %s28 = sphi 0, %s25
      %s29 = sphi 0, %s28
      %s45 = sphi 0, %s29
      %s49 = sphi 0, %s49
      %s51 = sphi 0, %s49
      %s52 = sphi 0, %s51
      %s66 = sphi 0, %s52
      %s72 = sphi 0, %s74
      %s75 = sphi 0, %s72
      %s76 = sphi 0, %s75
      %s92 = sphi 0, %s76
    $region4: #{tpu_custom_call.1} parent=1 // loop_header_branch
      %18 = sbr.rel (%p16) target = $region8
    $region5: #{tpu_custom_call.1} parent=1 // loop_body
      %s20 = ssub.s32 %s15, 1
      %s21 = ssub.s32 %s15, 2
      %s22 = sadd.s32 %s15, 1
      %s23 = ssub.s32 %s15, %s22
      %p24 = scmp.eq.s32.totalorder %s23, 0
      %s26 = sadd.s32 %s25, 1
      %s27 = scalar_select %p24, %s25, %s26
      %p30 = pneg %p24
      %p31 = scmp.eq.s32.totalorder %s15, 1
      %p32 = por %p30, %p31
      %p33 = scmp.ne.s32.totalorder %s25, %s28
      %p34 = scmp.eq.s32.totalorder %s15, 0
      %p35 = por %p33, %p34
      %p36 = scmp.ne.s32.totalorder %s25, %s28
      %p37 = scmp.eq.s32.totalorder %s20, 1
      %p38 = por %p36, %p37
      %p39 = scmp.ne.s32.totalorder %s28, %s29
      %p40 = scmp.eq.s32.totalorder %s20, 0
      %p41 = por %p39, %p40
      %p42 = scmp.ne.s32.totalorder %s28, %s29
      %p43 = scmp.eq.s32.totalorder %s21, 1
      %p44 = por %p42, %p43
      %p46 = scmp.ne.s32.totalorder %s29, %s45
      %p47 = scmp.eq.s32.totalorder %s21, 0
      %p48 = por %p46, %p47
      %s50 = sadd.s32 %s49, 1
      %p53 = scmp.eq.s32.totalorder %s15, 1
      %p54 = scmp.ne.s32.totalorder %s49, %s51
      %p55 = scmp.eq.s32.totalorder %s15, 0
      %p56 = por %p54, %p55
      %p57 = scmp.ne.s32.totalorder %s49, %s51
      %p58 = scmp.eq.s32.totalorder %s20, 1
      %p59 = por %p57, %p58
      %p60 = scmp.ne.s32.totalorder %s51, %s52
      %p61 = scmp.eq.s32.totalorder %s20, 0
      %p62 = por %p60, %p61
      %p63 = scmp.ne.s32.totalorder %s51, %s52
      %p64 = scmp.eq.s32.totalorder %s21, 1
      %p65 = por %p63, %p64
      %p67 = scmp.ne.s32.totalorder %s52, %s66
      %p68 = scmp.eq.s32.totalorder %s21, 0
      %p69 = por %p67, %p68
      %s70 = ssub.s32 %s15, %s22
      %p71 = scmp.eq.s32.totalorder %s70, 0
      %s73 = sadd.s32 %s72, 1
      %s74 = scalar_select %p71, %s72, %s73
      %p77 = pneg %p71
      %p78 = scmp.eq.s32.totalorder %s15, 1
      %p79 = por %p77, %p78
      %p80 = scmp.ne.s32.totalorder %s72, %s75
      %p81 = scmp.eq.s32.totalorder %s15, 0
      %p82 = por %p80, %p81
      %p83 = scmp.ne.s32.totalorder %s72, %s75
      %p84 = scmp.eq.s32.totalorder %s20, 1
      %p85 = por %p83, %p84
      %p86 = scmp.ne.s32.totalorder %s75, %s76
      %p87 = scmp.eq.s32.totalorder %s20, 0
      %p88 = por %p86, %p87
      %p89 = scmp.ne.s32.totalorder %s75, %s76
      %p90 = scmp.eq.s32.totalorder %s21, 1
      %p91 = por %p89, %p90
      %p93 = scmp.ne.s32.totalorder %s76, %s92
      %p94 = scmp.eq.s32.totalorder %s21, 0
      %p95 = por %p93, %p94
      %p96 = scmp.le.s32.totalorder 1, %s15
      %p97 = scmp.lt.s32.totalorder %s15, 3
      %p98 = pnand %p96, %p97
      %p99 = pneg %p98
      // Predicated region
      $region9: #{tpu_custom_call.1} parent=5 // pred_check
        _
      $region10: #{tpu_custom_call.1} parent=5 // pred_check_branch
        %101 = sbr.rel (%p98) target = $region12
      $region11: #{tpu_custom_call.1} parent=5 // pred_region
        %s102 = ssub.s32 %s15, 1
        // Predicated region
        $region13: #{tpu_custom_call.1} parent=11 // pred_check
          %p103 = pneg %p62
        $region14: #{tpu_custom_call.1} parent=11 // pred_check_branch
          %105 = sbr.rel (%p103) target = $region16
        $region15: #{tpu_custom_call.1} parent=11 // pred_region
          %107 = vsyncadd [#allocation6], 0
          %s109 = sshll.u32 %s1, 4
          %s110 = int_to_ptr.hbm [resolvable:$true] %s109
          %s111 = sshll.u32 [#allocation5], 4
          %s112 = int_to_ptr.vmem [resolvable:$true] %s111
          %114 = dma.hbm_to_vmem [thread:$0]  %s110, 128, %s112, [#allocation6]
        $region16: #{tpu_custom_call.1} parent=11 // pred_fallthru
          _
      $region12: #{tpu_custom_call.1} parent=5 // pred_fallthru
        _
      %p115 = scmp.lt.s32.totalorder %s15, 2
      // Predicated region
      $region17: #{tpu_custom_call.1} parent=5 // pred_check
        %p116 = pneg %p115
      $region18: #{tpu_custom_call.1} parent=5 // pred_check_branch
        %118 = sbr.rel (%p116) target = $region20
      $region19: #{tpu_custom_call.1} parent=5 // pred_region
        // Predicated region
        $region21: #{tpu_custom_call.1} parent=19 // pred_check
          %p119 = pneg %p35
        $region22: #{tpu_custom_call.1} parent=19 // pred_check_branch
          %121 = sbr.rel (%p119) target = $region24
        $region23: #{tpu_custom_call.1} parent=19 // pred_region
          %s122 = sand.u32 %s25, 1
          %s123 = scalar_lea.sflag [#allocation3], %s122
          %s124 = sand.u32 %s25, 1
          %s125 = smul.addr %s124, 8
          %s126 = scalar_lea.vmem [#allocation2], %s125
          %128 = vsyncadd %s123, 0
          %s129 = smul.addr %s15, 8
          %s130 = scalar_lea.hbm %s0, %s129
          %s132 = sshll.u32 %s130, 4
          %s133 = int_to_ptr.hbm [resolvable:$true] %s132
          %s134 = sshll.u32 %s126, 4
          %s135 = int_to_ptr.vmem [resolvable:$true] %s134
          %137 = dma.hbm_to_vmem [thread:$0]  %s133, 128, %s135, %s123
        $region24: #{tpu_custom_call.1} parent=19 // pred_fallthru
          _
      $region20: #{tpu_custom_call.1} parent=5 // pred_fallthru
        _
      %p138 = scmp.le.s32.totalorder 1, %s15
      %p139 = scmp.lt.s32.totalorder %s15, 3
      %p140 = pnand %p138, %p139
      %p141 = pneg %p140
      // Predicated region
      $region25: #{tpu_custom_call.1} parent=5 // pred_check
        _
      $region26: #{tpu_custom_call.1} parent=5 // pred_check_branch
        %143 = sbr.rel (%p140) target = $region28
      $region27: #{tpu_custom_call.1} parent=5 // pred_region
        %s144 = ssub.s32 %s15, 1
        %s145 = sand.u32 %s28, 1
        %s146 = scalar_lea.sflag [#allocation3], %s145
        %s147 = sand.u32 %s28, 1
        %s148 = smul.addr %s147, 8
        %s149 = scalar_lea.vmem [#allocation2], %s148
        // Predicated region
        $region29: #{tpu_custom_call.1} parent=27 // pred_check
          %p150 = pneg %p41
        $region30: #{tpu_custom_call.1} parent=27 // pred_check_branch
          %152 = sbr.rel (%p150) target = $region32
        $region31: #{tpu_custom_call.1} parent=27 // pred_region
          %154 = dma.done %s146, 128
        $region32: #{tpu_custom_call.1} parent=27 // pred_fallthru
          _
        // Predicated region
        $region33: #{tpu_custom_call.1} parent=27 // pred_check
          %p155 = pneg %p62
        $region34: #{tpu_custom_call.1} parent=27 // pred_check_branch
          %157 = sbr.rel (%p155) target = $region36
        $region35: #{tpu_custom_call.1} parent=27 // pred_region
          %159 = dma.done [#allocation6], 128
        $region36: #{tpu_custom_call.1} parent=27 // pred_fallthru
          _
        %s160 = sand.u32 %s28, 1
        %s161 = scalar_lea.sflag [#allocation3], %s160
        %s162 = sand.u32 %s28, 1
        %s163 = smul.addr %s162, 8
        %s164 = scalar_lea.vmem [#allocation2], %s163
        %p165 = pneg %p41
        %p166 = pneg %p38
        %p167 = pneg %p62
        %p168 = pneg %p59
        %p169 = pneg %p88
        %p170 = pneg %p85
        %s171 = sand.u32 %s75, 1
        %s172 = scalar_lea.sflag [#allocation4], %s171
        %s173 = sand.u32 %s75, 1
        %s174 = smul.addr %s173, 8
        %s175 = scalar_lea.vmem [#allocation7], %s174
        %v176 = vld [vmem:[%s149] sm:$0xff]
        %v177 = vld [vmem:[#allocation5] sm:$0xff]
        %v178 = vadd.f32 %v176, %v177
        %179 = vst [vmem:[%s175] sm:$0xff] %v178
        %s180 = sand.u32 %s75, 1
        %s181 = scalar_lea.sflag [#allocation4], %s180
        %s182 = sand.u32 %s75, 1
        %s183 = smul.addr %s182, 8
        %s184 = scalar_lea.vmem [#allocation7], %s183
        // Predicated region
        $region37: #{tpu_custom_call.1} parent=27 // pred_check
          %p185 = pneg %p85
        $region38: #{tpu_custom_call.1} parent=27 // pred_check_branch
          %187 = sbr.rel (%p185) target = $region40
        $region39: #{tpu_custom_call.1} parent=27 // pred_region
          %189 = vsyncadd %s181, 0
          %s190 = smul.addr %s20, 8
          %s191 = scalar_lea.hbm %s2, %s190
          %s193 = sshll.u32 %s184, 4
          %s194 = int_to_ptr.vmem [resolvable:$true] %s193
          %s195 = sshll.u32 %s191, 4
          %s196 = int_to_ptr.hbm [resolvable:$true] %s195
          %198 = dma.vmem_to_hbm [thread:$0]  %s194, 128, %s196, %s181
        $region40: #{tpu_custom_call.1} parent=27 // pred_fallthru
          _
      $region28: #{tpu_custom_call.1} parent=5 // pred_fallthru
        _
      %p199 = scmp.le.s32.totalorder 2, %s15
      // Predicated region
      $region41: #{tpu_custom_call.1} parent=5 // pred_check
        %p200 = pneg %p199
      $region42: #{tpu_custom_call.1} parent=5 // pred_check_branch
        %202 = sbr.rel (%p200) target = $region44
      $region43: #{tpu_custom_call.1} parent=5 // pred_region
        %s203 = ssub.s32 %s15, 2
        // Predicated region
        $region45: #{tpu_custom_call.1} parent=43 // pred_check
          %p204 = pneg %p91
        $region46: #{tpu_custom_call.1} parent=43 // pred_check_branch
          %206 = sbr.rel (%p204) target = $region48
        $region47: #{tpu_custom_call.1} parent=43 // pred_region
          %s207 = sand.u32 %s76, 1
          %s208 = scalar_lea.sflag [#allocation4], %s207
          %s209 = sand.u32 %s76, 1
          %s210 = smul.addr %s209, 8
          %s211 = scalar_lea.vmem [#allocation7], %s210
          %213 = dma.done %s208, 128
        $region48: #{tpu_custom_call.1} parent=43 // pred_fallthru
          _
      $region44: #{tpu_custom_call.1} parent=5 // pred_fallthru
        _
    $region6: #{tpu_custom_call.1} parent=1 // loop_footer
      %s19 = sadd.s32 1, %s15
    $region7: #{tpu_custom_call.1} parent=1 // loop_footer_branch
      %14 = sbr.rel target = $region3
    $region8: #{tpu_custom_call.1} parent=1 // loop_exit
      _
    %214 = vsyncpa [#allocation3], 1
    %s215 = scalar_lea.sflag [#allocation3], 1
    %216 = vsyncpa %s215, 1
    %217 = vsyncpa [#allocation6], 1
    %218 = vsyncpa [#allocation4], 1
    %s219 = scalar_lea.sflag [#allocation4], 1
    %220 = vsyncpa %s219, 1

// kernel: _mlp_impl.1
$region0: #{_mlp_impl.1}
  #allocation0 [shape = 'u32[]', space=smem, size = 0x4, offset = 0x4, fixed_abs, tag = 'smem constant byte address 0x4 - core index']
  #allocation1 [shape = 'u32[72,128]{1,0:T(1,128)}', space=vmem, size = 0x9000, scoped, tag = 'internal scratch']
  %s0 = inlined_call_operand.vmem [shape: bf16[16,32], index: 0, kind: input, shape index: {}]
  %s1 = inlined_call_operand.vmem [shape: bf16[32,64], index: 1, kind: input, shape index: {}]
  %s2 = inlined_call_operand.vmem [shape: f32[1,64], index: 2, kind: input, shape index: {}]
  %s3 = inlined_call_operand.vmem [shape: bf16[64,32], index: 3, kind: input, shape index: {}]
  %s4 = inlined_call_operand.vmem [shape: f32[1,32], index: 4, kind: input, shape index: {}]
  %s5 = inlined_call_operand.hbm [shape: f32[16,32], index: 5, kind: output, shape index: {}]
  %s6 = sld [smem:[#allocation0]]
  $region30: #{_mlp_impl.1} parent=0
    _
  %s8 = ssub.s32 1, %s6
  %s9 = scalar_select 0, %s8, %s6
  $region1: #{_mlp_impl.1} parent=0
    #allocation2 [shape = 'u8[8192]{0}', space=vmem, size = 0x2000, scoped, tag = 'output window, operand 0, single buffered']
    #allocation3 [shape = 's32[1]{0}', space=sflag, size = 0x4, scoped, tag = 'scoped memory for _mlp_impl.1']
    %10 = vsyncpa [#allocation3], 0
    // Predicated region
    $region2: #{_mlp_impl.1} parent=1 // pred_check
      _
    $region3: #{_mlp_impl.1} parent=1 // pred_check_branch
      %12 = sbr.rel (0) target = $region5
    $region4: #{_mlp_impl.1} parent=1 // pred_region
      _
    $region5: #{_mlp_impl.1} parent=1 // pred_fallthru
      _
    // Predicated region
    $region6: #{_mlp_impl.1} parent=1 // pred_check
      _
    $region7: #{_mlp_impl.1} parent=1 // pred_check_branch
      %14 = sbr.rel (0) target = $region9
    $region8: #{_mlp_impl.1} parent=1 // pred_region
      _
    $region9: #{_mlp_impl.1} parent=1 // pred_fallthru
      _
    // Predicated region
    $region10: #{_mlp_impl.1} parent=1 // pred_check
      _
    $region11: #{_mlp_impl.1} parent=1 // pred_check_branch
      %16 = sbr.rel (0) target = $region13
    $region12: #{_mlp_impl.1} parent=1 // pred_region
      _
    $region13: #{_mlp_impl.1} parent=1 // pred_fallthru
      _
    // Predicated region
    $region14: #{_mlp_impl.1} parent=1 // pred_check
      _
    $region15: #{_mlp_impl.1} parent=1 // pred_check_branch
      %18 = sbr.rel (0) target = $region17
    $region16: #{_mlp_impl.1} parent=1 // pred_region
      _
    $region17: #{_mlp_impl.1} parent=1 // pred_fallthru
      _
    // Predicated region
    $region18: #{_mlp_impl.1} parent=1 // pred_check
      _
    $region19: #{_mlp_impl.1} parent=1 // pred_check_branch
      %20 = sbr.rel (0) target = $region21
    $region20: #{_mlp_impl.1} parent=1 // pred_region
      _
    $region21: #{_mlp_impl.1} parent=1 // pred_fallthru
      _
    %v22 = vld [vmem:[%s0] sm:$0xf]
    %v23 = vld [vmem:[%s0 + $0x4] sm:$0xf]
    %v24 = vld [vmem:[%s1] sm:$0xf]
    %v25 = vld [vmem:[%s1 + $0x4] sm:$0xf]
    %v26 = vld [vmem:[%s1 + $0x8] sm:$0xf]
    %v27 = vld [vmem:[%s1 + $0xc] sm:$0xf]
    %v28 = vld [vmem:[%s2] sm:$0x1]
    %v30 = vperm.slane %v28, 0
    %v34 = vunpack.c.l.b16 %v22
    %v35 = vunpack.c.l.b16 %v23
    %v36 = vpack.c.b16 %v35, %v34
    %v41 = vunpack.c.l.b16 %v24
    %v42 = vunpack.c.l.b16 %v25
    %v43 = vunpack.c.l.b16 %v26
    %v44 = vunpack.c.l.b16 %v27
    %v45 = vpack.c.b16 %v42, %v41
    %v46 = vpack.c.b16 %v44, %v43
    %vm49 = vcmask 261120
    %v51 = vsel %vm49, %v36, 0
    %53 = vmatpush.bf16.msra.mxu0 0
    %54 = vmatpush.bf16.msra.mxu0 0
    %55 = vmatpush.bf16.msra.mxu0 0
    %56 = vmatpush.bf16.msra.mxu0 0
    %57 = vmatpush.bf16.msra.mxu0 0
    %58 = vmatpush.bf16.msra.mxu0 0
    %59 = vmatpush.bf16.msra.mxu0 %v46
    %60 = vmatpush.bf16.msra.mxu0 %v45
    %61 = vmatmul.bf16.gmra.mxu0 %v51
    %v62 = vpop.f32.mrf.mxu0
    %v63 = vadd.f32 %v30, %v62
    %v64 = vpop.f32.mrf.mxu0
    %v65 = vadd.f32 %v30, %v64
    %66 = vdwg.mxu0
    %v67 = vmul.f32 %v63, 0.5
    %v68 = vmul.f32 %v65, 0.5
    %v69 = vmul.f32 %v63, 0.70710677
    %v70 = vmul.f32 %v65, 0.70710677
    %v71 = vmul.f32 %v69, %v69
    %v72 = vmin.f32 16.0, %v71
    %v73 = vmul.f32 %v72, 2.1237322e-06
    %v74 = vadd.f32 %v73, 0.00028619796
    %v75 = vmul.f32 %v72, %v74
    %v76 = vadd.f32 %v75, 0.0036580483
    %v77 = vmul.f32 %v72, %v76
    %v78 = vadd.f32 %v77, 0.05243302
    %v79 = vmul.f32 %v72, %v78
    %v80 = vadd.f32 %v79, 0.18741608
    %v81 = vmul.f32 %v72, %v80
    %v82 = vadd.f32 %v81, 1.1283791
    %v83 = vmul.f32 %v69, %v82
    %v84 = vmul.f32 %v72, 3.8918573e-05
    %v85 = vadd.f32 %v84, 0.001143296
    %v86 = vmul.f32 %v72, %v85
    %v87 = vadd.f32 %v86, 0.014752088
    %v88 = vmul.f32 %v72, %v87
    %v89 = vadd.f32 %v88, 0.112945676
    %v90 = vmul.f32 %v72, %v89
    %v91 = vadd.f32 %v90, 0.4994258
    %v92 = vmul.f32 %v72, %v91
    %v93 = vadd.f32 %v92, 1.0
    %v94 = vrcp.pop %v93
    %v95 = vmul.f32 %v93, %v94
    %v96 = vsub.f32 1.0, %v95
    %v97 = vmul.f32 %v94, %v96
    %v98 = vadd.f32 %v94, %v97
    %vm99 = vweird.f32 %v93
    %vm100 = vweird.f32 %v94
    %vm101 = vmor %vm99, %vm100
    %v102 = vsel %vm101, %v94, %v98
    %v103 = vand.u32 2147483647, %v93
    %vm104 = vcmp.eq.f32.partialorder %v103, 8.507059e+37
    %v105 = vand.u32 %v93, 2147483648
    %v106 = vor.u32 1.1754944e-38, %v105
    %v107 = vsel %vm104, %v106, %v102
    %v108 = vmul.f32 %v83, %v107
    %v109 = vmin.f32 %v108, 1.0
    %v110 = vmax.f32 %v109, -1.0
    %v111 = vmul.f32 %v70, %v70
    %v112 = vmin.f32 16.0, %v111
    %v113 = vmul.f32 %v112, 2.1237322e-06
    %v114 = vadd.f32 %v113, 0.00028619796
    %v115 = vmul.f32 %v112, %v114
    %v116 = vadd.f32 %v115, 0.0036580483
    %v117 = vmul.f32 %v112, %v116
    %v118 = vadd.f32 %v117, 0.05243302
    %v119 = vmul.f32 %v112, %v118
    %v120 = vadd.f32 %v119, 0.18741608
    %v121 = vmul.f32 %v112, %v120
    %v122 = vadd.f32 %v121, 1.1283791
    %v123 = vmul.f32 %v70, %v122
    %v124 = vmul.f32 %v112, 3.8918573e-05
    %v125 = vadd.f32 %v124, 0.001143296
    %v126 = vmul.f32 %v112, %v125
    %v127 = vadd.f32 %v126, 0.014752088
    %v128 = vmul.f32 %v112, %v127
    %v129 = vadd.f32 %v128, 0.112945676
    %v130 = vmul.f32 %v112, %v129
    %v131 = vadd.f32 %v130, 0.4994258
    %v132 = vmul.f32 %v112, %v131
    %v133 = vadd.f32 %v132, 1.0
    %v134 = vrcp.pop %v133
    %v135 = vmul.f32 %v133, %v134
    %v136 = vsub.f32 1.0, %v135
    %v137 = vmul.f32 %v134, %v136
    %v138 = vadd.f32 %v134, %v137
    %vm139 = vweird.f32 %v133
    %vm140 = vweird.f32 %v134
    %vm141 = vmor %vm139, %vm140
    %v142 = vsel %vm141, %v134, %v138
    %v143 = vand.u32 2147483647, %v133
    %vm144 = vcmp.eq.f32.partialorder %v143, 8.507059e+37
    %v145 = vand.u32 %v133, 2147483648
    %v146 = vor.u32 1.1754944e-38, %v145
    %v147 = vsel %vm144, %v146, %v142
    %v148 = vmul.f32 %v123, %v147
    %v149 = vmin.f32 %v148, 1.0
    %v150 = vmax.f32 %v149, -1.0
    %v151 = vadd.f32 %v110, 1.0
    %v152 = vadd.f32 %v150, 1.0
    %v153 = vmul.f32 %v67, %v151
    %v154 = vmul.f32 %v68, %v152
    %v155 = vpack.c.bf16 %v154, %v153
    %v156 = vld [vmem:[%s3] sm:$0xf]
    %v157 = vld [vmem:[%s3 + $0x4] sm:$0xf]
    %v158 = vld [vmem:[%s3 + $0x8] sm:$0xf]
    %v159 = vld [vmem:[%s3 + $0xc] sm:$0xf]
    %v160 = vld [vmem:[%s3 + $0x10] sm:$0xf]
    %v161 = vld [vmem:[%s3 + $0x14] sm:$0xf]
    %v162 = vld [vmem:[%s3 + $0x18] sm:$0xf]
    %v163 = vld [vmem:[%s3 + $0x1c] sm:$0xf]
    %v164 = vld [vmem:[%s4] sm:$0x1]
    %v166 = vperm.slane %v164, 0
    %v176 = vunpack.c.l.b16 %v156
    %v177 = vunpack.c.l.b16 %v157
    %v178 = vunpack.c.l.b16 %v158
    %v179 = vunpack.c.l.b16 %v159
    %v180 = vunpack.c.l.b16 %v160
    %v181 = vunpack.c.l.b16 %v161
    %v182 = vunpack.c.l.b16 %v162
    %v183 = vunpack.c.l.b16 %v163
    %v184 = vpack.c.b16 %v177, %v176
    %v185 = vpack.c.b16 %v179, %v178
    %v186 = vpack.c.b16 %v181, %v180
    %v187 = vpack.c.b16 %v183, %v182
    %vm192 = vcmask 523264
    %v194 = vsel %vm192, %v155, 0
    %196 = vmatpush.bf16.msra.mxu0 0
    %197 = vmatpush.bf16.msra.mxu0 0
    %198 = vmatpush.bf16.msra.mxu0 0
    %199 = vmatpush.bf16.msra.mxu0 0
    %200 = vmatpush.bf16.msra.mxu0 %v187
    %201 = vmatpush.bf16.msra.mxu0 %v186
    %202 = vmatpush.bf16.msra.mxu0 %v185
    %203 = vmatpush.bf16.msra.mxu0 %v184
    %204 = vmatmul.bf16.gmra.mxu0 %v194
    %v205 = vpop.f32.mrf.mxu0
    %v206 = vadd.f32 %v166, %v205
    %v207 = vpop.f32.mrf.mxu0
    %v208 = vadd.f32 %v166, %v207
    %209 = vdwg.mxu0
    %210 = vst.msk [vmem:[#allocation2] sm:$0xff] %vm49, %v206
    %211 = vst.msk [vmem:[#allocation2 + $0x8] sm:$0xff] %vm49, %v208
    // Predicated region
    $region22: #{_mlp_impl.1} parent=1 // pred_check
      _
    $region23: #{_mlp_impl.1} parent=1 // pred_check_branch
      %213 = sbr.rel (0) target = $region25
    $region24: #{_mlp_impl.1} parent=1 // pred_region
      %215 = vsyncadd [#allocation3], 0
      %s216 = sshll.u32 [#allocation2], 4
      %s217 = int_to_ptr.vmem [resolvable:$true] %s216
      %s218 = sshll.u32 %s5, 4
      %s219 = int_to_ptr.hbm [resolvable:$true] %s218
      %224 = dma.vmem_to_hbm [thread:$0]  %s217, 256, %s219, [#allocation3], 128, 128, 8
    $region25: #{_mlp_impl.1} parent=1 // pred_fallthru
      _
    // Predicated region
    $region26: #{_mlp_impl.1} parent=1 // pred_check
      _
    $region27: #{_mlp_impl.1} parent=1 // pred_check_branch
      %226 = sbr.rel (0) target = $region29
    $region28: #{_mlp_impl.1} parent=1 // pred_region
      %228 = dma.done [#allocation3], 256
    $region29: #{_mlp_impl.1} parent=1 // pred_fallthru
      _
    %229 = vsyncpa [#allocation3], 1

</llo_original>
